<compile_context>
chip_gen: v7x
topology: tpu7x:2x2x1
jax: 0.10.0
libtpu: 0.0.40
codegen_flags: <defaults>
</compile_context>

<pallas_src>
import functools

import jax
import jax.numpy as jnp
from jax.experimental import pallas as pl
from jax.experimental.pallas import tpu as pltpu


def _stable_softplus(rho):
    # softplus(rho) = max(rho, 0) + log1p(exp(-|rho|))  (no overflow for large rho)
    return jnp.maximum(rho, 0.0) + jnp.log1p(jnp.exp(-jnp.abs(rho)))


def _bayes_linear_kernel(x_ref, wmu_ref, wrho_ref, epsw_ref,
                         bmu_ref, brho_ref, epsb_ref, o_ref, acc_ref,
                         *, apply_relu):
    k = pl.program_id(2)

    @pl.when(k == 0)
    def _init():
        acc_ref[...] = jnp.zeros_like(acc_ref)

    # Reparameterization in f32 on the pre-transposed [tk, tn] weight tiles.
    w_sigma = _stable_softplus(wrho_ref[...])
    w = wmu_ref[...] + w_sigma * epsw_ref[...]                 # [tk, tn]

    # bf16 operands feed the MXU natively; accumulate in f32. No transpose.
    acc_ref[...] += jnp.dot(x_ref[...].astype(jnp.bfloat16),
                            w.astype(jnp.bfloat16),
                            preferred_element_type=jnp.float32)

    @pl.when(k == pl.num_programs(2) - 1)
    def _finalize():
        b_sigma = _stable_softplus(brho_ref[...])
        b = bmu_ref[...] + b_sigma * epsb_ref[...]             # [1, tn]
        y = acc_ref[...] + b
        if apply_relu:
            y = jnp.maximum(y, 0.0)
        o_ref[...] = y.astype(o_ref.dtype)


def _round_up(x, m):
    return ((x + m - 1) // m) * m


def bayesian_linear_forward(x, weight_mu, weight_rho, bias_mu, bias_rho,
                            eps_w, eps_b, *, apply_relu=False,
                            tm=128, tn=256, tk=512):
    """x: [B, in_f]; weight_*: [out_f, in_f]; bias_*: [out_f] (all f32)."""
    B, in_f = x.shape
    out_f = weight_mu.shape[0]

    # One-time XLA transpose in the wrapper: [out_f, in_f] -> [in_f, out_f]
    # so the kernel matmul is [B,K]x[K,N] with lane axis == out_f (== output
    # lane axis). Kills the in-kernel XLU transpose.
    wmu_t = weight_mu.T
    wrho_t = weight_rho.T
    epsw_t = eps_w.T

    # Lane/sublane-aligned padding. Zero padding is exact: padded mu = 0 and
    # padded eps = 0 -> padded weight/bias entries are exactly 0, and padded x
    # columns are 0, so padded rows/cols contribute nothing.
    Mp = _round_up(B, 8)
    Kp = _round_up(in_f, 128)
    Np = _round_up(out_f, 128)
    tm = min(tm, Mp)
    tk = min(tk, Kp)
    tn = min(tn, Np)
    Mp = _round_up(Mp, tm)
    Kp = _round_up(Kp, tk)
    Np = _round_up(Np, tn)

    xp = jnp.pad(x, ((0, Mp - B), (0, Kp - in_f)))
    wmu_p = jnp.pad(wmu_t, ((0, Kp - in_f), (0, Np - out_f)))
    wrho_p = jnp.pad(wrho_t, ((0, Kp - in_f), (0, Np - out_f)))
    epsw_p = jnp.pad(epsw_t, ((0, Kp - in_f), (0, Np - out_f)))
    bmu_p = jnp.pad(bias_mu, (0, Np - out_f)).reshape(1, Np)
    brho_p = jnp.pad(bias_rho, (0, Np - out_f)).reshape(1, Np)
    epsb_p = jnp.pad(eps_b, (0, Np - out_f)).reshape(1, Np)

    grid = (Mp // tm, Np // tn, Kp // tk)
    kernel = functools.partial(_bayes_linear_kernel, apply_relu=apply_relu)

    out_p = pl.pallas_call(
        kernel,
        out_shape=jax.ShapeDtypeStruct((Mp, Np), x.dtype),
        grid_spec=pltpu.PrefetchScalarGridSpec(
            num_scalar_prefetch=0,
            grid=grid,
            in_specs=[
                pl.BlockSpec((tm, tk), lambda i, j, k: (i, k)),   # x
                pl.BlockSpec((tk, tn), lambda i, j, k: (k, j)),   # weight_mu^T
                pl.BlockSpec((tk, tn), lambda i, j, k: (k, j)),   # weight_rho^T
                pl.BlockSpec((tk, tn), lambda i, j, k: (k, j)),   # eps_w^T
                pl.BlockSpec((1, tn), lambda i, j, k: (0, j)),    # bias_mu
                pl.BlockSpec((1, tn), lambda i, j, k: (0, j)),    # bias_rho
                pl.BlockSpec((1, tn), lambda i, j, k: (0, j)),    # eps_b
            ],
            out_specs=pl.BlockSpec((tm, tn), lambda i, j, k: (i, j)),
            scratch_shapes=[pltpu.VMEM((tm, tn), jnp.float32)],
        ),
        compiler_params=pltpu.CompilerParams(
            dimension_semantics=("parallel", "parallel", "arbitrary")),
    )(xp, wmu_p, wrho_p, epsw_p, bmu_p, brho_p, epsb_p)

    return out_p[:B, :out_f]


def bayesian_feature_net_forward(x, layer_params, layer_eps):
    """layer_params[i] = (weight_mu, weight_rho, bias_mu, bias_rho);
       layer_eps[i]    = (eps_w, eps_b)."""
    out = x
    n = len(layer_params)
    for idx, (params, eps) in enumerate(zip(layer_params, layer_eps)):
        wmu, wrho, bmu, brho = params
        eps_w, eps_b = eps
        out = bayesian_linear_forward(out, wmu, wrho, bmu, brho, eps_w, eps_b,
                                      apply_relu=(idx < n - 1))
    return out


if __name__ == "__main__":
    # BayesianFeatureNet(input_dim=32, latent_dim=16, hidden_dims=(8,))
    batch, input_dim, latent_dim = 8, 32, 16
    hidden_dims = (8,)
    dims = [input_dim] + list(hidden_dims) + [latent_dim]

    key = jax.random.PRNGKey(0)
    key, kx = jax.random.split(key)
    x = jax.random.normal(kx, (batch, input_dim), jnp.float32)

    # Module init is (mu=0, rho=-3); perturb mu/rho slightly so the numerical
    # check is non-trivial while sigma = softplus(rho) stays well-behaved.
    layer_params, layer_eps = [], []
    for i in range(len(dims) - 1):
        in_f, out_f = dims[i], dims[i + 1]
        key, k1, k2, k3, k4, k5 = jax.random.split(key, 6)
        wmu = 0.1 * jax.random.normal(k1, (out_f, in_f), jnp.float32)
        wrho = -3.0 + 0.1 * jax.random.normal(k2, (out_f, in_f), jnp.float32)
        bmu = 0.1 * jax.random.normal(k3, (out_f,), jnp.float32)
        brho = jnp.full((out_f,), -3.0, jnp.float32)
        eps_w = jax.random.normal(k4, (out_f, in_f), jnp.float32)
        eps_b = jax.random.normal(k5, (out_f,), jnp.float32)
        layer_params.append((wmu, wrho, bmu, brho))
        layer_eps.append((eps_w, eps_b))

    y = bayesian_feature_net_forward(x, layer_params, layer_eps)
    y = jax.block_until_ready(y)
    assert y.shape == (batch, latent_dim)

    # Pure-JAX reference (sample=True path of the module).
    def ref_linear(h, wmu, wrho, bmu, brho, eps_w, eps_b):
        w = wmu + jax.nn.softplus(wrho) * eps_w
        b = bmu + jax.nn.softplus(brho) * eps_b
        return h @ w.T + b

    out_ref = x
    for idx, (params, eps) in enumerate(zip(layer_params, layer_eps)):
        out_ref = ref_linear(out_ref, *params, *eps)
        if idx < len(layer_params) - 1:
            out_ref = jax.nn.relu(out_ref)

    # Relaxed tolerance: kernel uses bf16 MXU operands vs the f32 reference.
    max_err = float(jnp.max(jnp.abs(y - out_ref)))
    assert jnp.allclose(y, out_ref, atol=2e-2, rtol=2e-2), max_err

    print("KERNEL_OK")
</pallas_src>

<mosaic_0001>
module attributes {stable_mosaic.version = 11 : i64} {
  func.func @_bayes_linear_kernel(%arg0: i32, %arg1: i32, %arg2: i32, %arg3: memref<8x128xf32, #tpu.memory_space<vmem>>, %arg4: memref<128x128xf32, #tpu.memory_space<vmem>>, %arg5: memref<128x128xf32, #tpu.memory_space<vmem>>, %arg6: memref<128x128xf32, #tpu.memory_space<vmem>>, %arg7: memref<1x128xf32, #tpu.memory_space<vmem>>, %arg8: memref<1x128xf32, #tpu.memory_space<vmem>>, %arg9: memref<1x128xf32, #tpu.memory_space<vmem>>, %arg10: memref<8x128xf32, #tpu.memory_space<vmem>>, %arg11: memref<8x128xf32, #tpu.memory_space<vmem>>) attributes {dimension_semantics = [#tpu.dimension_semantics<parallel>, #tpu.dimension_semantics<parallel>, #tpu.dimension_semantics<arbitrary>], iteration_bounds = array<i64: 1, 1, 1>, scalar_prefetch = 0 : i64, scratch_operands = 1 : i64, tpu.core_type = #tpu.core_type<tc>, window_params = [{transform_indices = @transform_0, window_bounds = array<i64: 8, 128>}, {transform_indices = @transform_1, window_bounds = array<i64: 128, 128>}, {transform_indices = @transform_2, window_bounds = array<i64: 128, 128>}, {transform_indices = @transform_3, window_bounds = array<i64: 128, 128>}, {transform_indices = @transform_4, window_bounds = array<i64: 1, 128>}, {transform_indices = @transform_5, window_bounds = array<i64: 1, 128>}, {transform_indices = @transform_6, window_bounds = array<i64: 1, 128>}, {transform_indices = @transform_7, window_bounds = array<i64: 8, 128>}]} {
    %c0_i32 = arith.constant 0 : i32
    %0 = arith.cmpi eq, %arg2, %c0_i32 : i32
    %1 = arith.extui %0 : i1 to i32
    %c0_i32_0 = arith.constant 0 : i32
    %2 = arith.cmpi ne, %1, %c0_i32_0 : i32
    scf.if %2 {
      %cst_16 = arith.constant 0.000000e+00 : f32
      %26 = vector.broadcast %cst_16 : f32 to vector<8x128xf32>
      %c0_17 = arith.constant 0 : index
      %c0_18 = arith.constant 0 : index
      %27 = vector.load %arg11[%c0_17, %c0_18] : memref<8x128xf32, #tpu.memory_space<vmem>>, vector<8x128xf32>
      tpu.vector_store %arg11[%c0_17, %c0_18], %26 {strides = array<i32>} : memref<8x128xf32, #tpu.memory_space<vmem>>, vector<8x128xf32>,
    } else {
    }
    %c0 = arith.constant 0 : index
    %c0_1 = arith.constant 0 : index
    %3 = vector.load %arg5[%c0, %c0_1] : memref<128x128xf32, #tpu.memory_space<vmem>>, vector<128x128xf32>
    %cst = arith.constant 0.000000e+00 : f32
    %4 = vector.broadcast %cst : f32 to vector<128x128xf32>
    %5 = arith.maximumf %3, %4 : vector<128x128xf32>
    %6 = math.absf %3 : vector<128x128xf32>
    %cst_2 = arith.constant 0.000000e+00 : f32
    %7 = vector.broadcast %cst_2 : f32 to vector<128x128xf32>
    %8 = arith.subf %7, %6 : vector<128x128xf32>
    %9 = math.exp %8 : vector<128x128xf32>
    %10 = math.log1p %9 : vector<128x128xf32>
    %11 = arith.addf %5, %10 : vector<128x128xf32>
    %c0_3 = arith.constant 0 : index
    %c0_4 = arith.constant 0 : index
    %12 = vector.load %arg4[%c0_3, %c0_4] : memref<128x128xf32, #tpu.memory_space<vmem>>, vector<128x128xf32>
    %c0_5 = arith.constant 0 : index
    %c0_6 = arith.constant 0 : index
    %13 = vector.load %arg6[%c0_5, %c0_6] : memref<128x128xf32, #tpu.memory_space<vmem>>, vector<128x128xf32>
    %14 = arith.mulf %11, %13 : vector<128x128xf32>
    %15 = arith.addf %12, %14 : vector<128x128xf32>
    %c0_7 = arith.constant 0 : index
    %c0_8 = arith.constant 0 : index
    %16 = vector.load %arg11[%c0_7, %c0_8] : memref<8x128xf32, #tpu.memory_space<vmem>>, vector<8x128xf32>
    %c0_9 = arith.constant 0 : index
    %c0_10 = arith.constant 0 : index
    %17 = vector.load %arg3[%c0_9, %c0_10] : memref<8x128xf32, #tpu.memory_space<vmem>>, vector<8x128xf32>
    %18 = arith.truncf %17 : vector<8x128xf32> to vector<8x128xbf16>
    %19 = arith.truncf %15 : vector<128x128xf32> to vector<128x128xbf16>
    %cst_11 = arith.constant dense<0.000000e+00> : vector<8x128xf32>
    %20 = tpu.matmul %18, %19, %cst_11 {dimension_numbers = #tpu.dot_dimension_numbers<[1], [0], [0], [1], [0, 0, 1, 1], [], []>} : vector<8x128xbf16>, vector<128x128xbf16>, vector<8x128xf32> -> vector<8x128xf32>
    %21 = arith.addf %16, %20 : vector<8x128xf32>
    %c0_12 = arith.constant 0 : index
    %c0_13 = arith.constant 0 : index
    %22 = vector.load %arg11[%c0_12, %c0_13] : memref<8x128xf32, #tpu.memory_space<vmem>>, vector<8x128xf32>
    tpu.vector_store %arg11[%c0_12, %c0_13], %21 {strides = array<i32>} : memref<8x128xf32, #tpu.memory_space<vmem>>, vector<8x128xf32>,
    %c0_i32_14 = arith.constant 0 : i32
    %23 = arith.cmpi eq, %arg2, %c0_i32_14 : i32
    %24 = arith.extui %23 : i1 to i32
    %c0_i32_15 = arith.constant 0 : i32
    %25 = arith.cmpi ne, %24, %c0_i32_15 : i32
    scf.if %25 {
      %c0_16 = arith.constant 0 : index
      %c0_17 = arith.constant 0 : index
      %26 = vector.load %arg8[%c0_16, %c0_17] : memref<1x128xf32, #tpu.memory_space<vmem>>, vector<1x128xf32>
      %cst_18 = arith.constant 0.000000e+00 : f32
      %27 = vector.broadcast %cst_18 : f32 to vector<1x128xf32>
      %28 = arith.maximumf %26, %27 : vector<1x128xf32>
      %29 = math.absf %26 : vector<1x128xf32>
      %cst_19 = arith.constant 0.000000e+00 : f32
      %30 = vector.broadcast %cst_19 : f32 to vector<1x128xf32>
      %31 = arith.subf %30, %29 : vector<1x128xf32>
      %32 = math.exp %31 : vector<1x128xf32>
      %33 = math.log1p %32 : vector<1x128xf32>
      %34 = arith.addf %28, %33 : vector<1x128xf32>
      %c0_20 = arith.constant 0 : index
      %c0_21 = arith.constant 0 : index
      %35 = vector.load %arg7[%c0_20, %c0_21] : memref<1x128xf32, #tpu.memory_space<vmem>>, vector<1x128xf32>
      %c0_22 = arith.constant 0 : index
      %c0_23 = arith.constant 0 : index
      %36 = vector.load %arg9[%c0_22, %c0_23] : memref<1x128xf32, #tpu.memory_space<vmem>>, vector<1x128xf32>
      %37 = arith.mulf %34, %36 : vector<1x128xf32>
      %38 = arith.addf %35, %37 : vector<1x128xf32>
      %c0_24 = arith.constant 0 : index
      %c0_25 = arith.constant 0 : index
      %39 = vector.load %arg11[%c0_24, %c0_25] : memref<8x128xf32, #tpu.memory_space<vmem>>, vector<8x128xf32>
      %40 = vector.broadcast %38 : vector<1x128xf32> to vector<8x128xf32>
      %41 = arith.addf %39, %40 : vector<8x128xf32>
      %cst_26 = arith.constant 0.000000e+00 : f32
      %42 = vector.broadcast %cst_26 : f32 to vector<8x128xf32>
      %43 = arith.maximumf %41, %42 : vector<8x128xf32>
      %c0_27 = arith.constant 0 : index
      %c0_28 = arith.constant 0 : index
      %44 = vector.load %arg10[%c0_27, %c0_28] : memref<8x128xf32, #tpu.memory_space<vmem>>, vector<8x128xf32>
      tpu.vector_store %arg10[%c0_27, %c0_28], %43 {strides = array<i32>} : memref<8x128xf32, #tpu.memory_space<vmem>>, vector<8x128xf32>,
    } else {
    }
    return
  }
  func.func @transform_0(%arg0: i32, %arg1: i32, %arg2: i32) -> (i32, i32) {
    %c0_i32 = arith.constant 0 : i32
    return %arg0, %arg2 : i32, i32
  }
  func.func @transform_1(%arg0: i32, %arg1: i32, %arg2: i32) -> (i32, i32) {
    %c0_i32 = arith.constant 0 : i32
    return %arg2, %arg1 : i32, i32
  }
  func.func @transform_2(%arg0: i32, %arg1: i32, %arg2: i32) -> (i32, i32) {
    %c0_i32 = arith.constant 0 : i32
    return %arg2, %arg1 : i32, i32
  }
  func.func @transform_3(%arg0: i32, %arg1: i32, %arg2: i32) -> (i32, i32) {
    %c0_i32 = arith.constant 0 : i32
    return %arg2, %arg1 : i32, i32
  }
  func.func @transform_4(%arg0: i32, %arg1: i32, %arg2: i32) -> (i32, i32) {
    %c0_i32 = arith.constant 0 : i32
    %c0_i32_0 = arith.constant 0 : i32
    return %c0_i32, %arg1 : i32, i32
  }
  func.func @transform_5(%arg0: i32, %arg1: i32, %arg2: i32) -> (i32, i32) {
    %c0_i32 = arith.constant 0 : i32
    %c0_i32_0 = arith.constant 0 : i32
    return %c0_i32, %arg1 : i32, i32
  }
  func.func @transform_6(%arg0: i32, %arg1: i32, %arg2: i32) -> (i32, i32) {
    %c0_i32 = arith.constant 0 : i32
    %c0_i32_0 = arith.constant 0 : i32
    return %c0_i32, %arg1 : i32, i32
  }
  func.func @transform_7(%arg0: i32, %arg1: i32, %arg2: i32) -> (i32, i32) {
    %c0_i32 = arith.constant 0 : i32
    return %arg0, %arg1 : i32, i32
  }
}

</mosaic_0001>

<llo_original>
// kernel: tpu_custom_call.1
$region0: #{tpu_custom_call.1}
  #allocation0 [shape = 'u32[]', space=smem, size = 0x4, offset = 0x4, fixed_abs, tag = 'smem constant byte address 0x4 - core index']
  #allocation1 [shape = 'u32[144,128]{1,0:T(1,128)}', space=vmem, size = 0x12000, scoped, tag = 'internal scratch']
  #allocation2 [shape = 'f32[8,128]{1,0:T(8,128)}', space=vmem, size = 0x1000, scoped, tag = 'scratch operand']
  %s0 = inlined_call_operand.hbm [shape: f32[8,128], index: 0, kind: input, shape index: {}]
  %s1 = inlined_call_operand.hbm [shape: f32[128,128], index: 1, kind: input, shape index: {}]
  %s2 = inlined_call_operand.hbm [shape: f32[128,128], index: 2, kind: input, shape index: {}]
  %s3 = inlined_call_operand.hbm [shape: f32[128,128], index: 3, kind: input, shape index: {}]
  %s4 = inlined_call_operand.vmem [shape: f32[1,128], index: 4, kind: input, shape index: {}]
  %s5 = inlined_call_operand.vmem [shape: f32[1,128], index: 5, kind: input, shape index: {}]
  %s6 = inlined_call_operand.vmem [shape: f32[1,128], index: 6, kind: input, shape index: {}]
  %s7 = inlined_call_operand.hbm [shape: f32[8,128], index: 7, kind: output, shape index: {}]
  %s8 = sld [smem:[#allocation0]]
  $region62: #{tpu_custom_call.1} parent=0
    _
  %s10 = ssub.s32 1, %s8
  %s11 = scalar_select 0, %s10, %s8
  $region1: #{tpu_custom_call.1} parent=0
    #allocation3 [shape = 'u8[4096]{0}', space=vmem, size = 0x1000, scoped, tag = 'input window, operand 0, single buffered']
    #allocation4 [shape = 's32[1]{0}', space=sflag, size = 0x4, scoped, tag = 'scoped memory for tpu_custom_call.1']
    #allocation5 [shape = 's32[1]{0}', space=sflag, size = 0x4, scoped, tag = 'scoped memory for tpu_custom_call.1']
    #allocation6 [shape = 'u8[65536]{0}', space=vmem, size = 0x10000, scoped, tag = 'input window, operand 1, single buffered']
    #allocation7 [shape = 's32[1]{0}', space=sflag, size = 0x4, scoped, tag = 'scoped memory for tpu_custom_call.1']
    #allocation8 [shape = 'u8[65536]{0}', space=vmem, size = 0x10000, scoped, tag = 'input window, operand 2, single buffered']
    #allocation9 [shape = 'u8[65536]{0}', space=vmem, size = 0x10000, scoped, tag = 'input window, operand 3, single buffered']
    #allocation10 [shape = 's32[1]{0}', space=sflag, size = 0x4, scoped, tag = 'scoped memory for tpu_custom_call.1']
    #allocation11 [shape = 'u8[4096]{0}', space=vmem, size = 0x1000, scoped, tag = 'output window, operand 0, single buffered']
    %12 = vsyncpa [#allocation4], 0
    %13 = vsyncpa [#allocation7], 0
    %14 = vsyncpa [#allocation10], 0
    %15 = vsyncpa [#allocation5], 0
    // Predicated region
    $region2: #{tpu_custom_call.1} parent=1 // pred_check
      _
    $region3: #{tpu_custom_call.1} parent=1 // pred_check_branch
      %17 = sbr.rel (0) target = $region5
    $region4: #{tpu_custom_call.1} parent=1 // pred_region
      %s19 = ssub.s32 128, 128
      %20 = vsyncadd [#allocation4], %s19
      %s22 = sshll.u32 [#allocation3], 4
      %s23 = int_to_ptr.vmem [resolvable:$true] %s22
      %25 = dma.hbm_to_vmem [thread:$0]  %s0, 128, %s23, [#allocation4]
    $region5: #{tpu_custom_call.1} parent=1 // pred_fallthru
      _
    // Predicated region
    $region6: #{tpu_custom_call.1} parent=1 // pred_check
      _
    $region7: #{tpu_custom_call.1} parent=1 // pred_check_branch
      %27 = sbr.rel (0) target = $region9
    $region8: #{tpu_custom_call.1} parent=1 // pred_region
      %s29 = ssub.s32 2048, 2048
      %30 = vsyncadd [#allocation7], %s29
      %s31 = sshll.u32 [#allocation6], 4
      %s32 = int_to_ptr.vmem [resolvable:$true] %s31
      %37 = dma.hbm_to_vmem [thread:$0]  %s1, 2048, %s32, [#allocation7], 128, 128, 8
    $region9: #{tpu_custom_call.1} parent=1 // pred_fallthru
      _
    // Predicated region
    $region10: #{tpu_custom_call.1} parent=1 // pred_check
      _
    $region11: #{tpu_custom_call.1} parent=1 // pred_check_branch
      %39 = sbr.rel (0) target = $region13
    $region12: #{tpu_custom_call.1} parent=1 // pred_region
      %s41 = ssub.s32 2048, 2048
      %42 = vsyncadd [#allocation7], %s41
      %s43 = sshll.u32 [#allocation8], 4
      %s44 = int_to_ptr.vmem [resolvable:$true] %s43
      %49 = dma.hbm_to_vmem [thread:$0]  %s2, 2048, %s44, [#allocation7], 128, 128, 8
    $region13: #{tpu_custom_call.1} parent=1 // pred_fallthru
      _
    // Predicated region
    $region14: #{tpu_custom_call.1} parent=1 // pred_check
      _
    $region15: #{tpu_custom_call.1} parent=1 // pred_check_branch
      %51 = sbr.rel (0) target = $region17
    $region16: #{tpu_custom_call.1} parent=1 // pred_region
      %s53 = ssub.s32 2048, 2048
      %54 = vsyncadd [#allocation10], %s53
      %s55 = sshll.u32 [#allocation9], 4
      %s56 = int_to_ptr.vmem [resolvable:$true] %s55
      %61 = dma.hbm_to_vmem [thread:$0]  %s3, 2048, %s56, [#allocation10], 128, 128, 8
    $region17: #{tpu_custom_call.1} parent=1 // pred_fallthru
      _
    // Predicated region
    $region18: #{tpu_custom_call.1} parent=1 // pred_check
      _
    $region19: #{tpu_custom_call.1} parent=1 // pred_check_branch
      %63 = sbr.rel (0) target = $region21
    $region20: #{tpu_custom_call.1} parent=1 // pred_region
      _
    $region21: #{tpu_custom_call.1} parent=1 // pred_fallthru
      _
    // Predicated region
    $region22: #{tpu_custom_call.1} parent=1 // pred_check
      _
    $region23: #{tpu_custom_call.1} parent=1 // pred_check_branch
      %65 = sbr.rel (0) target = $region25
    $region24: #{tpu_custom_call.1} parent=1 // pred_region
      _
    $region25: #{tpu_custom_call.1} parent=1 // pred_fallthru
      _
    // Predicated region
    $region26: #{tpu_custom_call.1} parent=1 // pred_check
      _
    $region27: #{tpu_custom_call.1} parent=1 // pred_check_branch
      %67 = sbr.rel (0) target = $region29
    $region28: #{tpu_custom_call.1} parent=1 // pred_region
      _
    $region29: #{tpu_custom_call.1} parent=1 // pred_fallthru
      _
    // Predicated region
    $region30: #{tpu_custom_call.1} parent=1 // pred_check
      _
    $region31: #{tpu_custom_call.1} parent=1 // pred_check_branch
      %69 = sbr.rel (0) target = $region33
    $region32: #{tpu_custom_call.1} parent=1 // pred_region
      %70 = dma.done [#allocation4], 128
    $region33: #{tpu_custom_call.1} parent=1 // pred_fallthru
      _
    // Predicated region
    $region34: #{tpu_custom_call.1} parent=1 // pred_check
      _
    $region35: #{tpu_custom_call.1} parent=1 // pred_check_branch
      %72 = sbr.rel (0) target = $region37
    $region36: #{tpu_custom_call.1} parent=1 // pred_region
      %73 = dma.done [#allocation7], 2048
    $region37: #{tpu_custom_call.1} parent=1 // pred_fallthru
      _
    // Predicated region
    $region38: #{tpu_custom_call.1} parent=1 // pred_check
      _
    $region39: #{tpu_custom_call.1} parent=1 // pred_check_branch
      %75 = sbr.rel (0) target = $region41
    $region40: #{tpu_custom_call.1} parent=1 // pred_region
      %76 = dma.done [#allocation7], 2048
    $region41: #{tpu_custom_call.1} parent=1 // pred_fallthru
      _
    // Predicated region
    $region42: #{tpu_custom_call.1} parent=1 // pred_check
      _
    $region43: #{tpu_custom_call.1} parent=1 // pred_check_branch
      %78 = sbr.rel (0) target = $region45
    $region44: #{tpu_custom_call.1} parent=1 // pred_region
      %79 = dma.done [#allocation10], 2048
    $region45: #{tpu_custom_call.1} parent=1 // pred_fallthru
      _
    %p81 = scmp.eq.s32.totalorder 0, 0
    // Predicated region
    $region46: #{tpu_custom_call.1} parent=1 // pred_check
      %p82 = pneg %p81
    $region47: #{tpu_custom_call.1} parent=1 // pred_check_branch
      %84 = sbr.rel (%p82) target = $region49
    $region48: #{tpu_custom_call.1} parent=1 // pred_region
      %85 = vst [vmem:[#allocation2] sm:$0xff] 0.0
    $region49: #{tpu_custom_call.1} parent=1 // pred_fallthru
      _
    %v86 = vld [vmem:[#allocation8] sm:$0xff]
    %v87 = vld [vmem:[#allocation8 + $0x8] sm:$0xff]
    %v88 = vld [vmem:[#allocation8 + $0x10] sm:$0xff]
    %v89 = vld [vmem:[#allocation8 + $0x18] sm:$0xff]
    %v90 = vld [vmem:[#allocation8 + $0x20] sm:$0xff]
    %v91 = vld [vmem:[#allocation8 + $0x28] sm:$0xff]
    %v92 = vld [vmem:[#allocation8 + $0x30] sm:$0xff]
    %v93 = vld [vmem:[#allocation8 + $0x38] sm:$0xff]
    %v94 = vld [vmem:[#allocation8 + $0x40] sm:$0xff]
    %v95 = vld [vmem:[#allocation8 + $0x48] sm:$0xff]
    %v96 = vld [vmem:[#allocation8 + $0x50] sm:$0xff]
    %v97 = vld [vmem:[#allocation8 + $0x58] sm:$0xff]
    %v98 = vld [vmem:[#allocation8 + $0x60] sm:$0xff]
    %v99 = vld [vmem:[#allocation8 + $0x68] sm:$0xff]
    %v100 = vld [vmem:[#allocation8 + $0x70] sm:$0xff]
    %v101 = vld [vmem:[#allocation8 + $0x78] sm:$0xff]
    %v102 = vmax.f32 %v86, 0.0
    %v103 = vmax.f32 %v87, 0.0
    %v104 = vmax.f32 %v88, 0.0
    %v105 = vmax.f32 %v89, 0.0
    %v106 = vmax.f32 %v90, 0.0
    %v107 = vmax.f32 %v91, 0.0
    %v108 = vmax.f32 %v92, 0.0
    %v109 = vmax.f32 %v93, 0.0
    %v110 = vmax.f32 %v94, 0.0
    %v111 = vmax.f32 %v95, 0.0
    %v112 = vmax.f32 %v96, 0.0
    %v113 = vmax.f32 %v97, 0.0
    %v114 = vmax.f32 %v98, 0.0
    %v115 = vmax.f32 %v99, 0.0
    %v116 = vmax.f32 %v100, 0.0
    %v117 = vmax.f32 %v101, 0.0
    %v118 = vand.u32 2147483647, %v86
    %v119 = vand.u32 2147483647, %v87
    %v120 = vand.u32 2147483647, %v88
    %v121 = vand.u32 2147483647, %v89
    %v122 = vand.u32 2147483647, %v90
    %v123 = vand.u32 2147483647, %v91
    %v124 = vand.u32 2147483647, %v92
    %v125 = vand.u32 2147483647, %v93
    %v126 = vand.u32 2147483647, %v94
    %v127 = vand.u32 2147483647, %v95
    %v128 = vand.u32 2147483647, %v96
    %v129 = vand.u32 2147483647, %v97
    %v130 = vand.u32 2147483647, %v98
    %v131 = vand.u32 2147483647, %v99
    %v132 = vand.u32 2147483647, %v100
    %v133 = vand.u32 2147483647, %v101
    %v134 = vsub.f32 0.0, %v118
    %v135 = vsub.f32 0.0, %v119
    %v136 = vsub.f32 0.0, %v120
    %v137 = vsub.f32 0.0, %v121
    %v138 = vsub.f32 0.0, %v122
    %v139 = vsub.f32 0.0, %v123
    %v140 = vsub.f32 0.0, %v124
    %v141 = vsub.f32 0.0, %v125
    %v142 = vsub.f32 0.0, %v126
    %v143 = vsub.f32 0.0, %v127
    %v144 = vsub.f32 0.0, %v128
    %v145 = vsub.f32 0.0, %v129
    %v146 = vsub.f32 0.0, %v130
    %v147 = vsub.f32 0.0, %v131
    %v148 = vsub.f32 0.0, %v132
    %v149 = vsub.f32 0.0, %v133
    %v150 = vmul.f32 %v134, 1.442695
    %v151 = vpow.pop %v150
    %v152 = vmul.f32 %v135, 1.442695
    %v153 = vpow.pop %v152
    %v154 = vmul.f32 %v136, 1.442695
    %v155 = vpow.pop %v154
    %v156 = vmul.f32 %v137, 1.442695
    %v157 = vpow.pop %v156
    %v158 = vmul.f32 %v138, 1.442695
    %v159 = vpow.pop %v158
    %v160 = vmul.f32 %v139, 1.442695
    %v161 = vpow.pop %v160
    %v162 = vmul.f32 %v140, 1.442695
    %v163 = vpow.pop %v162
    %v164 = vmul.f32 %v141, 1.442695
    %v165 = vpow.pop %v164
    %v166 = vmul.f32 %v142, 1.442695
    %v167 = vpow.pop %v166
    %v168 = vmul.f32 %v143, 1.442695
    %v169 = vpow.pop %v168
    %v170 = vmul.f32 %v144, 1.442695
    %v171 = vpow.pop %v170
    %v172 = vmul.f32 %v145, 1.442695
    %v173 = vpow.pop %v172
    %v174 = vmul.f32 %v146, 1.442695
    %v175 = vpow.pop %v174
    %v176 = vmul.f32 %v147, 1.442695
    %v177 = vpow.pop %v176
    %v178 = vmul.f32 %v148, 1.442695
    %v179 = vpow.pop %v178
    %v180 = vmul.f32 %v149, 1.442695
    %v181 = vpow.pop %v180
    %v182 = vadd.f32 %v151, 1.0
    %v183 = vlog2.pop %v182
    %v184 = vmul.f32 %v183, 0.6931472
    %v185 = vmul.f32 -0.5, %v151
    %v186 = vadd.f32 %v185, 1.0
    %v187 = vmul.f32 %v186, %v151
    %v188 = vand.u32 2147483647, %v151
    %vm189 = vcmp.lt.f32.partialorder %v188, 0.0004427343
    %v190 = vsel %vm189, %v187, %v184
    %v191 = vadd.f32 %v153, 1.0
    %v192 = vlog2.pop %v191
    %v193 = vmul.f32 %v192, 0.6931472
    %v194 = vmul.f32 -0.5, %v153
    %v195 = vadd.f32 %v194, 1.0
    %v196 = vmul.f32 %v195, %v153
    %v197 = vand.u32 2147483647, %v153
    %vm198 = vcmp.lt.f32.partialorder %v197, 0.0004427343
    %v199 = vsel %vm198, %v196, %v193
    %v200 = vadd.f32 %v155, 1.0
    %v201 = vlog2.pop %v200
    %v202 = vmul.f32 %v201, 0.6931472
    %v203 = vmul.f32 -0.5, %v155
    %v204 = vadd.f32 %v203, 1.0
    %v205 = vmul.f32 %v204, %v155
    %v206 = vand.u32 2147483647, %v155
    %vm207 = vcmp.lt.f32.partialorder %v206, 0.0004427343
    %v208 = vsel %vm207, %v205, %v202
    %v209 = vadd.f32 %v157, 1.0
    %v210 = vlog2.pop %v209
    %v211 = vmul.f32 %v210, 0.6931472
    %v212 = vmul.f32 -0.5, %v157
    %v213 = vadd.f32 %v212, 1.0
    %v214 = vmul.f32 %v213, %v157
    %v215 = vand.u32 2147483647, %v157
    %vm216 = vcmp.lt.f32.partialorder %v215, 0.0004427343
    %v217 = vsel %vm216, %v214, %v211
    %v218 = vadd.f32 %v159, 1.0
    %v219 = vlog2.pop %v218
    %v220 = vmul.f32 %v219, 0.6931472
    %v221 = vmul.f32 -0.5, %v159
    %v222 = vadd.f32 %v221, 1.0
    %v223 = vmul.f32 %v222, %v159
    %v224 = vand.u32 2147483647, %v159
    %vm225 = vcmp.lt.f32.partialorder %v224, 0.0004427343
    %v226 = vsel %vm225, %v223, %v220
    %v227 = vadd.f32 %v161, 1.0
    %v228 = vlog2.pop %v227
    %v229 = vmul.f32 %v228, 0.6931472
    %v230 = vmul.f32 -0.5, %v161
    %v231 = vadd.f32 %v230, 1.0
    %v232 = vmul.f32 %v231, %v161
    %v233 = vand.u32 2147483647, %v161
    %vm234 = vcmp.lt.f32.partialorder %v233, 0.0004427343
    %v235 = vsel %vm234, %v232, %v229
    %v236 = vadd.f32 %v163, 1.0
    %v237 = vlog2.pop %v236
    %v238 = vmul.f32 %v237, 0.6931472
    %v239 = vmul.f32 -0.5, %v163
    %v240 = vadd.f32 %v239, 1.0
    %v241 = vmul.f32 %v240, %v163
    %v242 = vand.u32 2147483647, %v163
    %vm243 = vcmp.lt.f32.partialorder %v242, 0.0004427343
    %v244 = vsel %vm243, %v241, %v238
    %v245 = vadd.f32 %v165, 1.0
    %v246 = vlog2.pop %v245
    %v247 = vmul.f32 %v246, 0.6931472
    %v248 = vmul.f32 -0.5, %v165
    %v249 = vadd.f32 %v248, 1.0
    %v250 = vmul.f32 %v249, %v165
    %v251 = vand.u32 2147483647, %v165
    %vm252 = vcmp.lt.f32.partialorder %v251, 0.0004427343
    %v253 = vsel %vm252, %v250, %v247
    %v254 = vadd.f32 %v167, 1.0
    %v255 = vlog2.pop %v254
    %v256 = vmul.f32 %v255, 0.6931472
    %v257 = vmul.f32 -0.5, %v167
    %v258 = vadd.f32 %v257, 1.0
    %v259 = vmul.f32 %v258, %v167
    %v260 = vand.u32 2147483647, %v167
    %vm261 = vcmp.lt.f32.partialorder %v260, 0.0004427343
    %v262 = vsel %vm261, %v259, %v256
    %v263 = vadd.f32 %v169, 1.0
    %v264 = vlog2.pop %v263
    %v265 = vmul.f32 %v264, 0.6931472
    %v266 = vmul.f32 -0.5, %v169
    %v267 = vadd.f32 %v266, 1.0
    %v268 = vmul.f32 %v267, %v169
    %v269 = vand.u32 2147483647, %v169
    %vm270 = vcmp.lt.f32.partialorder %v269, 0.0004427343
    %v271 = vsel %vm270, %v268, %v265
    %v272 = vadd.f32 %v171, 1.0
    %v273 = vlog2.pop %v272
    %v274 = vmul.f32 %v273, 0.6931472
    %v275 = vmul.f32 -0.5, %v171
    %v276 = vadd.f32 %v275, 1.0
    %v277 = vmul.f32 %v276, %v171
    %v278 = vand.u32 2147483647, %v171
    %vm279 = vcmp.lt.f32.partialorder %v278, 0.0004427343
    %v280 = vsel %vm279, %v277, %v274
    %v281 = vadd.f32 %v173, 1.0
    %v282 = vlog2.pop %v281
    %v283 = vmul.f32 %v282, 0.6931472
    %v284 = vmul.f32 -0.5, %v173
    %v285 = vadd.f32 %v284, 1.0
    %v286 = vmul.f32 %v285, %v173
    %v287 = vand.u32 2147483647, %v173
    %vm288 = vcmp.lt.f32.partialorder %v287, 0.0004427343
    %v289 = vsel %vm288, %v286, %v283
    %v290 = vadd.f32 %v175, 1.0
    %v291 = vlog2.pop %v290
    %v292 = vmul.f32 %v291, 0.6931472
    %v293 = vmul.f32 -0.5, %v175
    %v294 = vadd.f32 %v293, 1.0
    %v295 = vmul.f32 %v294, %v175
    %v296 = vand.u32 2147483647, %v175
    %vm297 = vcmp.lt.f32.partialorder %v296, 0.0004427343
    %v298 = vsel %vm297, %v295, %v292
    %v299 = vadd.f32 %v177, 1.0
    %v300 = vlog2.pop %v299
    %v301 = vmul.f32 %v300, 0.6931472
    %v302 = vmul.f32 -0.5, %v177
    %v303 = vadd.f32 %v302, 1.0
    %v304 = vmul.f32 %v303, %v177
    %v305 = vand.u32 2147483647, %v177
    %vm306 = vcmp.lt.f32.partialorder %v305, 0.0004427343
    %v307 = vsel %vm306, %v304, %v301
    %v308 = vadd.f32 %v179, 1.0
    %v309 = vlog2.pop %v308
    %v310 = vmul.f32 %v309, 0.6931472
    %v311 = vmul.f32 -0.5, %v179
    %v312 = vadd.f32 %v311, 1.0
    %v313 = vmul.f32 %v312, %v179
    %v314 = vand.u32 2147483647, %v179
    %vm315 = vcmp.lt.f32.partialorder %v314, 0.0004427343
    %v316 = vsel %vm315, %v313, %v310
    %v317 = vadd.f32 %v181, 1.0
    %v318 = vlog2.pop %v317
    %v319 = vmul.f32 %v318, 0.6931472
    %v320 = vmul.f32 -0.5, %v181
    %v321 = vadd.f32 %v320, 1.0
    %v322 = vmul.f32 %v321, %v181
    %v323 = vand.u32 2147483647, %v181
    %vm324 = vcmp.lt.f32.partialorder %v323, 0.0004427343
    %v325 = vsel %vm324, %v322, %v319
    %v326 = vadd.f32 %v102, %v190
    %v327 = vadd.f32 %v103, %v199
    %v328 = vadd.f32 %v104, %v208
    %v329 = vadd.f32 %v105, %v217
    %v330 = vadd.f32 %v106, %v226
    %v331 = vadd.f32 %v107, %v235
    %v332 = vadd.f32 %v108, %v244
    %v333 = vadd.f32 %v109, %v253
    %v334 = vadd.f32 %v110, %v262
    %v335 = vadd.f32 %v111, %v271
    %v336 = vadd.f32 %v112, %v280
    %v337 = vadd.f32 %v113, %v289
    %v338 = vadd.f32 %v114, %v298
    %v339 = vadd.f32 %v115, %v307
    %v340 = vadd.f32 %v116, %v316
    %v341 = vadd.f32 %v117, %v325
    %v342 = vld [vmem:[#allocation6] sm:$0xff]
    %v343 = vld [vmem:[#allocation6 + $0x8] sm:$0xff]
    %v344 = vld [vmem:[#allocation6 + $0x10] sm:$0xff]
    %v345 = vld [vmem:[#allocation6 + $0x18] sm:$0xff]
    %v346 = vld [vmem:[#allocation6 + $0x20] sm:$0xff]
    %v347 = vld [vmem:[#allocation6 + $0x28] sm:$0xff]
    %v348 = vld [vmem:[#allocation6 + $0x30] sm:$0xff]
    %v349 = vld [vmem:[#allocation6 + $0x38] sm:$0xff]
    %v350 = vld [vmem:[#allocation6 + $0x40] sm:$0xff]
    %v351 = vld [vmem:[#allocation6 + $0x48] sm:$0xff]
    %v352 = vld [vmem:[#allocation6 + $0x50] sm:$0xff]
    %v353 = vld [vmem:[#allocation6 + $0x58] sm:$0xff]
    %v354 = vld [vmem:[#allocation6 + $0x60] sm:$0xff]
    %v355 = vld [vmem:[#allocation6 + $0x68] sm:$0xff]
    %v356 = vld [vmem:[#allocation6 + $0x70] sm:$0xff]
    %v357 = vld [vmem:[#allocation6 + $0x78] sm:$0xff]
    %v358 = vld [vmem:[#allocation9] sm:$0xff]
    %v359 = vld [vmem:[#allocation9 + $0x8] sm:$0xff]
    %v360 = vld [vmem:[#allocation9 + $0x10] sm:$0xff]
    %v361 = vld [vmem:[#allocation9 + $0x18] sm:$0xff]
    %v362 = vld [vmem:[#allocation9 + $0x20] sm:$0xff]
    %v363 = vld [vmem:[#allocation9 + $0x28] sm:$0xff]
    %v364 = vld [vmem:[#allocation9 + $0x30] sm:$0xff]
    %v365 = vld [vmem:[#allocation9 + $0x38] sm:$0xff]
    %v366 = vld [vmem:[#allocation9 + $0x40] sm:$0xff]
    %v367 = vld [vmem:[#allocation9 + $0x48] sm:$0xff]
    %v368 = vld [vmem:[#allocation9 + $0x50] sm:$0xff]
    %v369 = vld [vmem:[#allocation9 + $0x58] sm:$0xff]
    %v370 = vld [vmem:[#allocation9 + $0x60] sm:$0xff]
    %v371 = vld [vmem:[#allocation9 + $0x68] sm:$0xff]
    %v372 = vld [vmem:[#allocation9 + $0x70] sm:$0xff]
    %v373 = vld [vmem:[#allocation9 + $0x78] sm:$0xff]
    %v374 = vmul.f32 %v326, %v358
    %v375 = vmul.f32 %v327, %v359
    %v376 = vmul.f32 %v328, %v360
    %v377 = vmul.f32 %v329, %v361
    %v378 = vmul.f32 %v330, %v362
    %v379 = vmul.f32 %v331, %v363
    %v380 = vmul.f32 %v332, %v364
    %v381 = vmul.f32 %v333, %v365
    %v382 = vmul.f32 %v334, %v366
    %v383 = vmul.f32 %v335, %v367
    %v384 = vmul.f32 %v336, %v368
    %v385 = vmul.f32 %v337, %v369
    %v386 = vmul.f32 %v338, %v370
    %v387 = vmul.f32 %v339, %v371
    %v388 = vmul.f32 %v340, %v372
    %v389 = vmul.f32 %v341, %v373
    %v390 = vadd.f32 %v342, %v374
    %v391 = vadd.f32 %v343, %v375
    %v392 = vadd.f32 %v344, %v376
    %v393 = vadd.f32 %v345, %v377
    %v394 = vadd.f32 %v346, %v378
    %v395 = vadd.f32 %v347, %v379
    %v396 = vadd.f32 %v348, %v380
    %v397 = vadd.f32 %v349, %v381
    %v398 = vadd.f32 %v350, %v382
    %v399 = vadd.f32 %v351, %v383
    %v400 = vadd.f32 %v352, %v384
    %v401 = vadd.f32 %v353, %v385
    %v402 = vadd.f32 %v354, %v386
    %v403 = vadd.f32 %v355, %v387
    %v404 = vadd.f32 %v356, %v388
    %v405 = vadd.f32 %v357, %v389
    %v406 = vld [vmem:[#allocation2] sm:$0xff]
    %v407 = vld [vmem:[#allocation3] sm:$0xff]
    %v408 = vpack.c.bf16 %v407, %v407
    %v409 = vpack.c.bf16 %v391, %v390
    %v410 = vpack.c.bf16 %v393, %v392
    %v411 = vpack.c.bf16 %v395, %v394
    %v412 = vpack.c.bf16 %v397, %v396
    %v413 = vpack.c.bf16 %v399, %v398
    %v414 = vpack.c.bf16 %v401, %v400
    %v415 = vpack.c.bf16 %v403, %v402
    %v416 = vpack.c.bf16 %v405, %v404
    %417 = vmatprep.subr.bf16.mxu0 0
    %418 = vmatpush1.bf16.msra.mxu0 %v409
    %419 = vmatprep.subr.bf16.mxu0 0
    %420 = vmatpush1.bf16.msra.mxu0 %v410
    %421 = vmatprep.subr.bf16.mxu0 0
    %422 = vmatpush1.bf16.msra.mxu0 %v411
    %423 = vmatprep.subr.bf16.mxu0 0
    %424 = vmatpush1.bf16.msra.mxu0 %v412
    %425 = vmatprep.subr.bf16.mxu0 0
    %426 = vmatpush1.bf16.msra.mxu0 %v413
    %427 = vmatprep.subr.bf16.mxu0 0
    %428 = vmatpush1.bf16.msra.mxu0 %v414
    %429 = vmatprep.subr.bf16.mxu0 0
    %430 = vmatpush1.bf16.msra.mxu0 %v415
    %431 = vmatprep.subr.bf16.mxu0 0
    %432 = vmatpush1.bf16.msra.mxu0 %v416
    %433 = vmatprep.subr.bf16.mxu0 0
    %434 = vmatpush1.bf16.msra.mxu0 0
    %435 = vmatprep.subr.bf16.mxu0 0
    %436 = vmatpush1.bf16.msra.mxu0 0
    %437 = vmatprep.subr.bf16.mxu0 0
    %438 = vmatpush1.bf16.msra.mxu0 0
    %439 = vmatprep.subr.bf16.mxu0 0
    %440 = vmatpush1.bf16.msra.mxu0 0
    %441 = vmatprep.subr.bf16.mxu0 0
    %442 = vmatpush1.bf16.msra.mxu0 0
    %443 = vmatprep.subr.bf16.mxu0 0
    %444 = vmatpush1.bf16.msra.mxu0 0
    %445 = vmatprep.subr.bf16.mxu0 0
    %446 = vmatpush1.bf16.msra.mxu0 0
    %447 = vmatprep.subr.bf16.mxu0 0
    %448 = vmatpush1.bf16.msra.mxu0 0
    %449 = vmatprep.mubr.bf16.mxu0 0
    %450 = vmatmul.mubr.bf16.gmra.mrb[0].mxu0 %v408
    %v451 = vpop.f32.mrb[0].mxu0
    %v452 = vadd.f32 0.0, %v451
    %v453 = vpop.f32.mrb[0].mxu0
    %v454 = vpop.f32.mrb[0].mxu0
    %v455 = vpop.f32.mrb[0].mxu0
    %456 = vdwg.mxu0
    %v457 = vadd.f32 %v406, %v452
    %458 = vst [vmem:[#allocation2] sm:$0xff] %v457
    // Predicated region
    $region50: #{tpu_custom_call.1} parent=1 // pred_check
      %p459 = pneg %p81
    $region51: #{tpu_custom_call.1} parent=1 // pred_check_branch
      %461 = sbr.rel (%p459) target = $region53
    $region52: #{tpu_custom_call.1} parent=1 // pred_region
      %v462 = vld [vmem:[%s5] sm:$0x1]
      %v463 = vmax.f32 %v462, 0.0
      %v464 = vand.u32 2147483647, %v462
      %v465 = vsub.f32 0.0, %v464
      %v466 = vmul.f32 %v465, 1.442695
      %v467 = vpow.pop %v466
      %v468 = vadd.f32 %v467, 1.0
      %v469 = vlog2.pop %v468
      %v470 = vmul.f32 %v469, 0.6931472
      %v471 = vmul.f32 -0.5, %v467
      %v472 = vadd.f32 %v471, 1.0
      %v473 = vmul.f32 %v472, %v467
      %v474 = vand.u32 2147483647, %v467
      %vm475 = vcmp.lt.f32.partialorder %v474, 0.0004427343
      %v476 = vsel %vm475, %v473, %v470
      %v477 = vadd.f32 %v463, %v476
      %v478 = vld [vmem:[%s4] sm:$0x1]
      %v479 = vld [vmem:[%s6] sm:$0x1]
      %v480 = vmul.f32 %v477, %v479
      %v481 = vadd.f32 %v478, %v480
      %v482 = vld [vmem:[#allocation2] sm:$0xff]
      %v484 = vlaneseq
      %v485 = vshrl.u32 %v484, 7
      %v486 = vsub.s32 0, %v485
      %v487 = vrot.slane %v481, %v486
      %v489 = vadd.f32 %v482, %v487
      %v490 = vmax.f32 %v489, 0.0
      %491 = vst [vmem:[#allocation11] sm:$0xff] %v490
    $region53: #{tpu_custom_call.1} parent=1 // pred_fallthru
      _
    // Predicated region
    $region54: #{tpu_custom_call.1} parent=1 // pred_check
      _
    $region55: #{tpu_custom_call.1} parent=1 // pred_check_branch
      %493 = sbr.rel (0) target = $region57
    $region56: #{tpu_custom_call.1} parent=1 // pred_region
      %s495 = ssub.s32 128, 128
      %496 = vsyncadd [#allocation5], %s495
      %s498 = sshll.u32 [#allocation11], 4
      %s499 = int_to_ptr.vmem [resolvable:$true] %s498
      %501 = dma.vmem_to_hbm [thread:$0]  %s499, 128, %s7, [#allocation5]
    $region57: #{tpu_custom_call.1} parent=1 // pred_fallthru
      _
    // Predicated region
    $region58: #{tpu_custom_call.1} parent=1 // pred_check
      _
    $region59: #{tpu_custom_call.1} parent=1 // pred_check_branch
      %503 = sbr.rel (0) target = $region61
    $region60: #{tpu_custom_call.1} parent=1 // pred_region
      %504 = dma.done [#allocation5], 128
    $region61: #{tpu_custom_call.1} parent=1 // pred_fallthru
      _
    %505 = vsyncpa [#allocation4], 1
    %506 = vsyncpa [#allocation7], 1
    %507 = vsyncpa [#allocation10], 1
    %508 = vsyncpa [#allocation5], 1

</llo_original>
